<compile_context>
chip_gen: v7x
topology: tpu7x:2x2x1
jax: 0.10.0
libtpu: 0.0.40
codegen_flags: <defaults>
</compile_context>

<pallas_src>
import jax
import jax.numpy as jnp
from jax.experimental import pallas as pl
from jax.experimental.pallas import tpu as pltpu

# Packed-parameter column layout inside the (10, 15) params array:
#   col 0      : W1 column   (10 out-features x 1 in-feature)
#   col 1      : b1
#   cols 2:12  : W2           (out, in) -- torch layout, used as W2 @ h1
#   col 12     : b2
#   col 13     : W3 column    (10 in-features of the single output)
#   col 14     : b3 at row 0 (rest zero)


def _mlp_kernel(x_ref, p_ref, o_ref):
    x = x_ref[...]                      # (1, TB)  batch on lanes

    w1 = p_ref[:, 0:1]                  # (10, 1)
    b1 = p_ref[:, 1:2]                  # (10, 1)
    w2 = p_ref[:, 2:12]                 # (10, 10) (out, in)
    b2 = p_ref[:, 12:13]                # (10, 1)
    w3 = p_ref[:, 13:14]                # (10, 1)
    b3 = p_ref[0:1, 14:15]              # (1, 1)

    # Layer 1: Linear(1->10) as an outer product on the VPU (no MXU).
    h1 = jnp.maximum(w1 * x + b1, 0.0)                      # (10, TB)

    # Layer 2: Linear(10->10) on the MXU, f32 accumulation.
    h2 = jnp.dot(w2, h1, preferred_element_type=jnp.float32) + b2
    h2 = jnp.maximum(h2, 0.0)                               # (10, TB)

    # Layer 3: Linear(10->1) as elementwise mul + sublane reduce (XLU).
    out = jnp.sum(w3 * h2, axis=0, keepdims=True) + b3      # (1, TB)

    o_ref[...] = out.astype(o_ref.dtype)                    # lane-dense store


def net_forward(x, params, *, block_batch=512):
    """x: (B, 1) float32, params: packed (10, 15) float32 -> (B, 1) float32."""
    B = x.shape[0]
    xt = x.reshape(1, B).astype(jnp.float32)    # batch onto the lane axis

    b_aligned = pl.cdiv(B, 128) * 128           # lane-aligned batch
    tb = min(block_batch, b_aligned)            # batch tile (multiple of 128)
    b_pad = pl.cdiv(B, tb) * tb                 # padded batch (multiple of tb)
    if b_pad != B:
        xt = jnp.pad(xt, ((0, 0), (0, b_pad - B)))

    out = pl.pallas_call(
        _mlp_kernel,
        out_shape=jax.ShapeDtypeStruct((1, b_pad), jnp.float32),
        grid=(b_pad // tb,),
        in_specs=[
            pl.BlockSpec((1, tb), lambda i: (0, i)),          # streamed x tile
            pl.BlockSpec(params.shape, lambda i: (0, 0)),     # resident weights
        ],
        out_specs=pl.BlockSpec((1, tb), lambda i: (0, i)),
        compiler_params=pltpu.CompilerParams(
            dimension_semantics=("parallel",),
        ),
    )(xt, params)

    return out[:, :B].reshape(B, 1)


def init_params(key):
    """PyTorch-layout params, nn.Linear default init U(-1/sqrt(fan_in), +)."""
    ks = jax.random.split(key, 6)

    def linear(kw, kb, fan_in, fan_out):
        bound = 1.0 / (fan_in ** 0.5)
        w = jax.random.uniform(kw, (fan_out, fan_in), jnp.float32, -bound, bound)
        b = jax.random.uniform(kb, (fan_out,), jnp.float32, -bound, bound)
        return w, b

    w1, b1 = linear(ks[0], ks[1], 1, 10)
    w2, b2 = linear(ks[2], ks[3], 10, 10)
    w3, b3 = linear(ks[4], ks[5], 10, 1)
    return w1, b1, w2, b2, w3, b3


def pack_params(w1, b1, w2, b2, w3, b3):
    """Pack all six tensors into one (10, 15) VMEM operand."""
    b3_col = jnp.zeros((10, 1), jnp.float32).at[0, 0].set(b3.reshape(())[()])
    return jnp.concatenate(
        [
            w1.reshape(10, 1),      # col 0
            b1.reshape(10, 1),      # col 1
            w2,                     # cols 2:12  (out, in)
            b2.reshape(10, 1),      # col 12
            w3.reshape(10, 1),      # col 13
            b3_col,                 # col 14 (b3 at row 0)
        ],
        axis=1,
    ).astype(jnp.float32)


def net_reference(x, w1, b1, w2, b2, w3, b3):
    """Pure-JAX reference matching torch.nn.Linear (x @ W^T + b)."""
    h1 = jnp.maximum(x @ w1.T + b1, 0.0)
    h2 = jnp.maximum(h1 @ w2.T + b2, 0.0)
    return h2 @ w3.T + b3


if __name__ == "__main__":
    key = jax.random.PRNGKey(0)
    k_x, k_p = jax.random.split(key)

    raw = init_params(k_p)
    params = pack_params(*raw)

    # Small batch (padded to one 128-lane tile, grid = 1).
    B = 8
    x = jax.random.normal(k_x, (B, 1), jnp.float32)
    out = jax.block_until_ready(net_forward(x, params))
    ref = net_reference(x, *raw)
    assert out.shape == (B, 1)
    assert jnp.allclose(out, ref, atol=1e-5, rtol=1e-5), "mismatch vs reference (B=8)"

    # Larger batch exercising padding + multi-step pipelined grid.
    B2 = 300
    x2 = jax.random.normal(k_x, (B2, 1), jnp.float32)
    out2 = jax.block_until_ready(net_forward(x2, params, block_batch=128))
    ref2 = net_reference(x2, *raw)
    assert out2.shape == (B2, 1)
    assert jnp.allclose(out2, ref2, atol=1e-5, rtol=1e-5), "mismatch vs reference (B=300)"

    print("KERNEL_OK")
</pallas_src>

<mosaic_0001>
module attributes {stable_mosaic.version = 11 : i64} {
  func.func @_mlp_kernel(%arg0: i32, %arg1: memref<1x128xf32, #tpu.memory_space<vmem>>, %arg2: memref<10x15xf32, #tpu.memory_space<vmem>>, %arg3: memref<1x128xf32, #tpu.memory_space<vmem>>) attributes {dimension_semantics = [#tpu.dimension_semantics<parallel>], iteration_bounds = array<i64: 1>, scalar_prefetch = 0 : i64, scratch_operands = 0 : i64, tpu.core_type = #tpu.core_type<tc>, window_params = [{transform_indices = @transform_0, window_bounds = array<i64: 1, 128>}, {pipeline_mode = #tpu.pipeline_mode<synchronous>, transform_indices = @transform_1, window_bounds = array<i64: 10, 15>}, {transform_indices = @transform_2, window_bounds = array<i64: 1, 128>}]} {
    %c0 = arith.constant 0 : index
    %c0_0 = arith.constant 0 : index
    %0 = vector.load %arg1[%c0, %c0_0] : memref<1x128xf32, #tpu.memory_space<vmem>>, vector<1x128xf32>
    %c0_1 = arith.constant 0 : index
    %c0_2 = arith.constant 0 : index
    %1 = vector.load %arg2[%c0_1, %c0_2] : memref<10x15xf32, #tpu.memory_space<vmem>>, vector<10x1xf32>
    %c0_3 = arith.constant 0 : index
    %c1 = arith.constant 1 : index
    %2 = vector.load %arg2[%c0_3, %c1] : memref<10x15xf32, #tpu.memory_space<vmem>>, vector<10x1xf32>
    %c0_4 = arith.constant 0 : index
    %c2 = arith.constant 2 : index
    %3 = vector.load %arg2[%c0_4, %c2] : memref<10x15xf32, #tpu.memory_space<vmem>>, vector<10x10xf32>
    %c0_5 = arith.constant 0 : index
    %c12 = arith.constant 12 : index
    %4 = vector.load %arg2[%c0_5, %c12] : memref<10x15xf32, #tpu.memory_space<vmem>>, vector<10x1xf32>
    %c0_6 = arith.constant 0 : index
    %c13 = arith.constant 13 : index
    %5 = vector.load %arg2[%c0_6, %c13] : memref<10x15xf32, #tpu.memory_space<vmem>>, vector<10x1xf32>
    %c0_7 = arith.constant 0 : index
    %c14 = arith.constant 14 : index
    %6 = vector.load %arg2[%c0_7, %c14] : memref<10x15xf32, #tpu.memory_space<vmem>>, vector<1x1xf32>
    %7 = vector.broadcast %1 : vector<10x1xf32> to vector<10x128xf32>
    %8 = vector.broadcast %0 : vector<1x128xf32> to vector<10x128xf32>
    %9 = arith.mulf %7, %8 : vector<10x128xf32>
    %10 = vector.broadcast %2 : vector<10x1xf32> to vector<10x128xf32>
    %11 = arith.addf %9, %10 : vector<10x128xf32>
    %cst = arith.constant 0.000000e+00 : f32
    %12 = vector.broadcast %cst : f32 to vector<10x128xf32>
    %13 = arith.maximumf %11, %12 : vector<10x128xf32>
    %cst_8 = arith.constant dense<0.000000e+00> : vector<10x128xf32>
    %14 = tpu.matmul %3, %13, %cst_8 {dimension_numbers = #tpu.dot_dimension_numbers<[1], [0], [0], [1], [0, 0, 1, 1], [], []>} : vector<10x10xf32>, vector<10x128xf32>, vector<10x128xf32> -> vector<10x128xf32>
    %15 = vector.broadcast %4 : vector<10x1xf32> to vector<10x128xf32>
    %16 = arith.addf %14, %15 : vector<10x128xf32>
    %cst_9 = arith.constant 0.000000e+00 : f32
    %17 = vector.broadcast %cst_9 : f32 to vector<10x128xf32>
    %18 = arith.maximumf %16, %17 : vector<10x128xf32>
    %19 = vector.broadcast %5 : vector<10x1xf32> to vector<10x128xf32>
    %20 = arith.mulf %19, %18 : vector<10x128xf32>
    %cst_10 = arith.constant dense<0.000000e+00> : vector<128xf32>
    %21 = vector.multi_reduction <add>, %20, %cst_10 [0] : vector<10x128xf32> to vector<128xf32>
    %22 = vector.shape_cast %21 : vector<128xf32> to vector<1x128xf32>
    %23 = vector.broadcast %6 : vector<1x1xf32> to vector<1x128xf32>
    %24 = arith.addf %22, %23 : vector<1x128xf32>
    %c0_11 = arith.constant 0 : index
    %c0_12 = arith.constant 0 : index
    %25 = vector.load %arg3[%c0_11, %c0_12] : memref<1x128xf32, #tpu.memory_space<vmem>>, vector<1x128xf32>
    tpu.vector_store %arg3[%c0_11, %c0_12], %24 {strides = array<i32>} : memref<1x128xf32, #tpu.memory_space<vmem>>, vector<1x128xf32>,
    return
  }
  func.func @transform_0(%arg0: i32) -> (i32, i32) {
    %c0_i32 = arith.constant 0 : i32
    %c0_i32_0 = arith.constant 0 : i32
    return %c0_i32, %arg0 : i32, i32
  }
  func.func @transform_1(%arg0: i32) -> (i32, i32) {
    %c0_i32 = arith.constant 0 : i32
    %c0_i32_0 = arith.constant 0 : i32
    %c0_i32_1 = arith.constant 0 : i32
    return %c0_i32, %c0_i32_0 : i32, i32
  }
  func.func @transform_2(%arg0: i32) -> (i32, i32) {
    %c0_i32 = arith.constant 0 : i32
    %c0_i32_0 = arith.constant 0 : i32
    return %c0_i32, %arg0 : i32, i32
  }
}

</mosaic_0001>

<llo_original>
// kernel: tpu_custom_call.1
$region0: #{tpu_custom_call.1}
  #allocation0 [shape = 'u32[]', space=smem, size = 0x4, offset = 0x4, fixed_abs, tag = 'smem constant byte address 0x4 - core index']
  #allocation1 [shape = 'u32[144,128]{1,0:T(1,128)}', space=vmem, size = 0x12000, scoped, tag = 'internal scratch']
  %s0 = inlined_call_operand.hbm [shape: f32[1,128], index: 0, kind: input, shape index: {}]
  %s1 = inlined_call_operand.hbm [shape: f32[10,15], index: 1, kind: input, shape index: {}]
  %s2 = inlined_call_operand.hbm [shape: f32[1,128], index: 2, kind: output, shape index: {}]
  %s3 = sld [smem:[#allocation0]]
  $region26: #{tpu_custom_call.1} parent=0
    _
  %s5 = ssub.s32 1, %s3
  %s6 = scalar_select 0, %s5, %s3
  $region1: #{tpu_custom_call.1} parent=0
    #allocation2 [shape = 'u8[512]{0}', space=vmem, size = 0x400, scoped, tag = 'input window, operand 0, single buffered']
    #allocation3 [shape = 's32[1]{0}', space=sflag, size = 0x4, scoped, tag = 'scoped memory for tpu_custom_call.1']
    #allocation4 [shape = 's32[1]{0}', space=sflag, size = 0x4, scoped, tag = 'scoped memory for tpu_custom_call.1']
    #allocation5 [shape = 'u8[8192]{0}', space=vmem, size = 0x2000, scoped, tag = 'input window, operand 1, single buffered']
    #allocation6 [shape = 's32[1]{0}', space=sflag, size = 0x4, scoped, tag = 'scoped memory for tpu_custom_call.1']
    #allocation7 [shape = 'u8[512]{0}', space=vmem, size = 0x400, scoped, tag = 'output window, operand 0, single buffered']
    %7 = vsyncpa [#allocation3], 0
    %8 = vsyncpa [#allocation6], 0
    %9 = vsyncpa [#allocation4], 0
    // Predicated region
    $region2: #{tpu_custom_call.1} parent=1 // pred_check
      _
    $region3: #{tpu_custom_call.1} parent=1 // pred_check_branch
      %11 = sbr.rel (0) target = $region5
    $region4: #{tpu_custom_call.1} parent=1 // pred_region
      %s13 = ssub.s32 16, 16
      %14 = vsyncadd [#allocation3], %s13
      %s16 = sshll.u32 [#allocation2], 4
      %s17 = int_to_ptr.vmem [resolvable:$true] %s16
      %19 = dma.hbm_to_vmem [thread:$0]  %s0, 16, %s17, [#allocation3]
    $region5: #{tpu_custom_call.1} parent=1 // pred_fallthru
      _
    // Predicated region
    $region6: #{tpu_custom_call.1} parent=1 // pred_check
      _
    $region7: #{tpu_custom_call.1} parent=1 // pred_check_branch
      %21 = sbr.rel (0) target = $region9
    $region8: #{tpu_custom_call.1} parent=1 // pred_region
      %s23 = ssub.s32 256, 256
      %24 = vsyncadd [#allocation6], %s23
      %s25 = sshll.u32 [#allocation5], 4
      %s26 = int_to_ptr.vmem [resolvable:$true] %s25
      %31 = dma.hbm_to_vmem [thread:$0]  %s1, 256, %s26, [#allocation6], 128, 128, 8
    $region9: #{tpu_custom_call.1} parent=1 // pred_fallthru
      _
    // Predicated region
    $region10: #{tpu_custom_call.1} parent=1 // pred_check
      _
    $region11: #{tpu_custom_call.1} parent=1 // pred_check_branch
      %33 = sbr.rel (0) target = $region13
    $region12: #{tpu_custom_call.1} parent=1 // pred_region
      %34 = dma.done [#allocation3], 16
    $region13: #{tpu_custom_call.1} parent=1 // pred_fallthru
      _
    // Predicated region
    $region14: #{tpu_custom_call.1} parent=1 // pred_check
      _
    $region15: #{tpu_custom_call.1} parent=1 // pred_check_branch
      %36 = sbr.rel (0) target = $region17
    $region16: #{tpu_custom_call.1} parent=1 // pred_region
      %37 = dma.done [#allocation6], 256
    $region17: #{tpu_custom_call.1} parent=1 // pred_fallthru
      _
    %v38 = vld [vmem:[#allocation2] sm:$0x1]
    %v39 = vld [vmem:[#allocation5] sm:$0xff]
    %v40 = vld [vmem:[#allocation5 + $0x8] sm:$0x3]
    %v41 = vld [vmem:[#allocation5] sm:$0x1]
    %43 = vset.pattern.permute.xlu0 0
    %44 = vperm.xlu0 %43, %v39
    %v45 = vpop.permute.xlu0 %44
    %48 = vset.pattern.permute.xlu0 0
    %49 = vperm.xlu0 %48, %v40
    %v50 = vpop.permute.xlu0 %49
    %v53 = vlaneseq
    %v54 = vshrl.u32 %v53, 7
    %v55 = vsub.s32 0, %v54
    %v56 = vrot.slane %v38, %v55
    %v58 = vmul.f32 %v45, %v56
    %v59 = vmul.f32 %v50, %v56
    %60 = vset.pattern.permute.xlu0 1
    %61 = vperm.xlu0 %60, %v39
    %v62 = vpop.permute.xlu0 %61
    %64 = vset.pattern.permute.xlu0 1
    %65 = vperm.xlu0 %64, %v40
    %v66 = vpop.permute.xlu0 %65
    %v68 = vadd.f32 %v58, %v62
    %v69 = vadd.f32 %v59, %v66
    %v70 = vmax.f32 %v68, 0.0
    %v71 = vmax.f32 %v69, 0.0
    %72 = vset.pattern.permute.xlu0 12
    %73 = vperm.xlu0 %72, %v39
    %v74 = vpop.permute.xlu0 %73
    %76 = vset.pattern.permute.xlu0 12
    %77 = vperm.xlu0 %76, %v40
    %v78 = vpop.permute.xlu0 %77
    %80 = vrot.lane.b32.xlu0 %v39, 126
    %v81 = vpop.permute.xlu0 %80
    %82 = vrot.lane.b32.xlu0 %v40, 126
    %v83 = vpop.permute.xlu0 %82
    %vm84 = vcmask 80896
    %v85 = vsel %vm84, %v81, 0
    %v87 = vsel %vm84, %v83, 0
    %vm89 = vcmask 1041408
    %v91 = vsel %vm89, %v71, 0
    %93 = vmatprep.subr.mxu0 0.0
    %94 = vmatpush1.msra.mxu0 %v70
    %95 = vmatprep.subr.mxu0 0.0
    %96 = vmatpush1.msra.mxu0 %v91
    %97 = vmatprep.subr.mxu0 0.0
    %98 = vmatpush1.msra.mxu0 0.0
    %99 = vmatprep.subr.mxu0 0.0
    %100 = vmatpush1.msra.mxu0 0.0
    %101 = vmatprep.subr.mxu0 0.0
    %102 = vmatpush1.msra.mxu0 0.0
    %103 = vmatprep.subr.mxu0 0.0
    %104 = vmatpush1.msra.mxu0 0.0
    %105 = vmatprep.subr.mxu0 0.0
    %106 = vmatpush1.msra.mxu0 0.0
    %107 = vmatprep.subr.mxu0 0.0
    %108 = vmatpush1.msra.mxu0 0.0
    %109 = vmatprep.subr.mxu0 0.0
    %110 = vmatpush1.msra.mxu0 0.0
    %111 = vmatprep.subr.mxu0 0.0
    %112 = vmatpush1.msra.mxu0 0.0
    %113 = vmatprep.subr.mxu0 0.0
    %114 = vmatpush1.msra.mxu0 0.0
    %115 = vmatprep.subr.mxu0 0.0
    %116 = vmatpush1.msra.mxu0 0.0
    %117 = vmatprep.subr.mxu0 0.0
    %118 = vmatpush1.msra.mxu0 0.0
    %119 = vmatprep.subr.mxu0 0.0
    %120 = vmatpush1.msra.mxu0 0.0
    %121 = vmatprep.subr.mxu0 0.0
    %122 = vmatpush1.msra.mxu0 0.0
    %123 = vmatprep.subr.mxu0 0.0
    %124 = vmatpush1.msra.mxu0 0.0
    %125 = vmatprep.subr.mxu0 0.0
    %126 = vmatpush1.msra.mxu0 0.0
    %127 = vmatprep.subr.mxu0 0.0
    %128 = vmatpush1.msra.mxu0 0.0
    %129 = vmatprep.subr.mxu0 0.0
    %130 = vmatpush1.msra.mxu0 0.0
    %131 = vmatprep.subr.mxu0 0.0
    %132 = vmatpush1.msra.mxu0 0.0
    %133 = vmatprep.subr.mxu0 0.0
    %134 = vmatpush1.msra.mxu0 0.0
    %135 = vmatprep.subr.mxu0 0.0
    %136 = vmatpush1.msra.mxu0 0.0
    %137 = vmatprep.subr.mxu0 0.0
    %138 = vmatpush1.msra.mxu0 0.0
    %139 = vmatprep.subr.mxu0 0.0
    %140 = vmatpush1.msra.mxu0 0.0
    %141 = vmatprep.subr.mxu0 0.0
    %142 = vmatpush1.msra.mxu0 0.0
    %143 = vmatprep.subr.mxu0 0.0
    %144 = vmatpush1.msra.mxu0 0.0
    %145 = vmatprep.subr.mxu0 0.0
    %146 = vmatpush1.msra.mxu0 0.0
    %147 = vmatprep.subr.mxu0 0.0
    %148 = vmatpush1.msra.mxu0 0.0
    %149 = vmatprep.subr.mxu0 0.0
    %150 = vmatpush1.msra.mxu0 0.0
    %151 = vmatprep.subr.mxu0 0.0
    %152 = vmatpush1.msra.mxu0 0.0
    %153 = vmatprep.subr.mxu0 0.0
    %154 = vmatpush1.msra.mxu0 0.0
    %155 = vmatprep.subr.mxu0 0.0
    %156 = vmatpush1.msra.mxu0 0.0
    %157 = vmatprep.mubr.f32.mxu0 0.0
    %158 = vmatmul.mubr.f32.gmra.mrb[0].mxu0 %v85
    %v159 = vpop.f32.mrb[0].mxu0
    %v160 = vadd.f32 %v74, %v159
    %v161 = vpop.f32.mrb[0].mxu0
    %162 = vmatprep.mubr.f32.mxu0 0.0
    %163 = vmatmul.mubr.f32.gmra.mrb[0].mxu0 %v87
    %v164 = vpop.f32.mrb[0].mxu0
    %v165 = vadd.f32 %v78, %v164
    %v166 = vpop.f32.mrb[0].mxu0
    %167 = vdwg.mxu0
    %v168 = vmax.f32 %v160, 0.0
    %v169 = vmax.f32 %v165, 0.0
    %170 = vset.pattern.permute.xlu0 13
    %171 = vperm.xlu0 %170, %v39
    %v172 = vpop.permute.xlu0 %171
    %174 = vset.pattern.permute.xlu0 13
    %175 = vperm.xlu0 %174, %v40
    %v176 = vpop.permute.xlu0 %175
    %v178 = vmul.f32 %v172, %v168
    %v179 = vmul.f32 %v176, %v169
    %v180 = vsel %vm89, %v179, 0.0
    %v181 = vadd.f32 %v178, %v180
    %v182 = vrot.slane %v181, 4
    %v183 = vadd.f32 %v181, %v182
    %v184 = vrot.slane %v183, 2
    %v185 = vadd.f32 %v183, %v184
    %v186 = vrot.slane %v185, 1
    %v187 = vadd.f32 %v185, %v186
    %189 = vset.pattern.permute.xlu0 14
    %190 = vperm.xlu0 %189, %v41
    %v191 = vpop.permute.xlu0 %190
    %v193 = vadd.f32 %v187, %v191
    %194 = vst [vmem:[#allocation7] sm:$0x1] %v193
    // Predicated region
    $region18: #{tpu_custom_call.1} parent=1 // pred_check
      _
    $region19: #{tpu_custom_call.1} parent=1 // pred_check_branch
      %196 = sbr.rel (0) target = $region21
    $region20: #{tpu_custom_call.1} parent=1 // pred_region
      %s198 = ssub.s32 16, 16
      %199 = vsyncadd [#allocation4], %s198
      %s201 = sshll.u32 [#allocation7], 4
      %s202 = int_to_ptr.vmem [resolvable:$true] %s201
      %204 = dma.vmem_to_hbm [thread:$0]  %s202, 16, %s2, [#allocation4]
    $region21: #{tpu_custom_call.1} parent=1 // pred_fallthru
      _
    // Predicated region
    $region22: #{tpu_custom_call.1} parent=1 // pred_check
      _
    $region23: #{tpu_custom_call.1} parent=1 // pred_check_branch
      %206 = sbr.rel (0) target = $region25
    $region24: #{tpu_custom_call.1} parent=1 // pred_region
      %207 = dma.done [#allocation4], 16
    $region25: #{tpu_custom_call.1} parent=1 // pred_fallthru
      _
    %208 = vsyncpa [#allocation3], 1
    %209 = vsyncpa [#allocation6], 1
    %210 = vsyncpa [#allocation4], 1

</llo_original>
